<compile_context>
chip_gen: v7x
topology: tpu7x:2x2x1
jax: 0.10.0
libtpu: 0.0.40
codegen_flags: <defaults>
</compile_context>

<pallas_src>
import jax
import jax.numpy as jnp
from jax.experimental import pallas as pl
from jax.experimental.pallas import tpu as pltpu

LANES = 128


def svm_decision_kernel(b_ref, w_ref, xT_ref, score_ref, pred_ref):
    # Hoist the bias once onto the scalar path (SMEM -> sreg).
    bias = b_ref[0]
    x = xT_ref[...]                      # (D, TB)  batch on the 128-lane axis
    w = w_ref[...]                       # (D, 1)   resident across the grid
    # VPU multiply + XLU sublane-reduce; MXU deliberately skipped (N=1 matvec).
    scores = jnp.sum(x * w, axis=0, keepdims=True) + bias      # (1, TB) f32
    score_ref[...] = scores
    # Fused prediction epilogue (free VPU select under the mem-bound roofline).
    pred_ref[...] = jnp.where(scores >= 0.0, jnp.float32(1.0), jnp.float32(-1.0))


def svm_forward(x, w, b, *, tb_max=1024):
    """Linear SVM decision function + class prediction via a Pallas kernel.

    x: (B, D) float32
    w: (D, 1) float32
    b: (1,)   float32 (scalar bias, lives in SMEM)
    returns: (scores (B,), preds (B,)) float32
    """
    B, D = x.shape
    assert w.shape == (D, 1) and b.shape == (1,)

    # Pad batch up to a multiple of 128 so it packs densely on the lane axis.
    B_pad = pl.cdiv(B, LANES) * LANES
    if B_pad != B:
        x = jnp.pad(x, ((0, B_pad - B), (0, 0)))
    # Layout change done in the wrapper (not in-kernel): batch -> lane axis.
    xT = x.T                              # (D, B_pad)
    w_col = w.reshape(D, 1).astype(jnp.float32)

    # Batch tile: multiple of 128, divides B_pad, capped so a double-buffered
    # x tile (2 * TB * D * 4 bytes) stays <= ~24 MiB (safe for v7x's 64 MiB VMEM).
    tb_cap = max(LANES, ((24 << 20) // (2 * D * 4)) // LANES * LANES)
    TB = min(B_pad, max(LANES, (tb_max // LANES) * LANES), tb_cap)
    while B_pad % TB:
        TB -= LANES
    grid = (B_pad // TB,)

    # Scoped-VMEM budget: double-buffered x tile + two double-buffered output
    # tiles + resident w, plus slack for compiler scratch.
    x_buf = 2 * TB * D * 4
    out_buf = 2 * 2 * TB * 4
    vmem_limit = min(x_buf + out_buf + 2 * D * 4 + (8 << 20), 48 << 20)

    scores_full, preds_full = pl.pallas_call(
        svm_decision_kernel,
        out_shape=(
            jax.ShapeDtypeStruct((1, B_pad), jnp.float32),
            jax.ShapeDtypeStruct((1, B_pad), jnp.float32),
        ),
        grid=grid,
        in_specs=[
            pl.BlockSpec(memory_space=pltpu.MemorySpace.SMEM),   # bias scalar
            pl.BlockSpec((D, 1), lambda i: (0, 0)),              # w, resident
            pl.BlockSpec((D, TB), lambda i: (0, i)),             # x^T batch tile
        ],
        out_specs=(
            pl.BlockSpec((1, TB), lambda i: (0, i)),             # scores, lane-dense
            pl.BlockSpec((1, TB), lambda i: (0, i)),             # preds, lane-dense
        ),
        compiler_params=pltpu.CompilerParams(
            dimension_semantics=("parallel",),
            vmem_limit_bytes=int(vmem_limit),
        ),
    )(b.astype(jnp.float32), w_col, xT)

    return scores_full[0, :B], preds_full[0, :B]


if __name__ == "__main__":
    # Deterministic synthetic parameters (module __init__ only fixes input_size).
    # TODO(synk): sklearn SVC fitting (training) has no Pallas equivalent; only
    # the fitted linear decision function is implemented here.
    batch = 200          # non-multiple of 128 to exercise the padding path
    input_size = 32

    key = jax.random.PRNGKey(0)
    kx, kw, kb = jax.random.split(key, 3)

    x = jax.random.normal(kx, (batch, input_size), dtype=jnp.float32)
    w = jax.random.normal(kw, (input_size, 1), dtype=jnp.float32) * 0.1
    b = jax.random.normal(kb, (1,), dtype=jnp.float32) * 0.1

    # tb_max=128 -> padded batch of 256 split into 2 grid steps (exercises tiling).
    scores, preds = svm_forward(x, w, b, tb_max=128)
    jax.block_until_ready((scores, preds))

    # Reference check in plain JAX.
    ref_scores = (x @ w)[:, 0] + b[0]
    ref_preds = jnp.where(ref_scores >= 0, 1.0, -1.0)
    assert scores.shape == (batch,)
    assert preds.shape == (batch,)
    assert jnp.allclose(scores, ref_scores, atol=1e-5), "score mismatch vs reference"
    assert jnp.array_equal(preds, ref_preds), "prediction mismatch vs reference"

    print("KERNEL_OK")
</pallas_src>

<mosaic_0001>
module attributes {stable_mosaic.version = 11 : i64} {
  func.func @svm_decision_kernel(%arg0: i32, %arg1: memref<1xf32, #tpu.memory_space<smem>>, %arg2: memref<32x1xf32, #tpu.memory_space<vmem>>, %arg3: memref<32x128xf32, #tpu.memory_space<vmem>>, %arg4: memref<1x128xf32, #tpu.memory_space<vmem>>, %arg5: memref<1x128xf32, #tpu.memory_space<vmem>>) attributes {dimension_semantics = [#tpu.dimension_semantics<parallel>], iteration_bounds = array<i64: 2>, scalar_prefetch = 0 : i64, scratch_operands = 0 : i64, tpu.core_type = #tpu.core_type<tc>, window_params = [{transform_indices = @transform_0, window_bounds = array<i64: 1>}, {pipeline_mode = #tpu.pipeline_mode<synchronous>, transform_indices = @transform_1, window_bounds = array<i64: 32, 1>}, {transform_indices = @transform_2, window_bounds = array<i64: 32, 128>}, {transform_indices = @transform_3, window_bounds = array<i64: 1, 128>}, {transform_indices = @transform_4, window_bounds = array<i64: 1, 128>}]} {
    %c0 = arith.constant 0 : index
    %0 = memref.load %arg1[%c0] : memref<1xf32, #tpu.memory_space<smem>>
    %c0_0 = arith.constant 0 : index
    %c0_1 = arith.constant 0 : index
    %1 = vector.load %arg3[%c0_0, %c0_1] : memref<32x128xf32, #tpu.memory_space<vmem>>, vector<32x128xf32>
    %c0_2 = arith.constant 0 : index
    %c0_3 = arith.constant 0 : index
    %2 = vector.load %arg2[%c0_2, %c0_3] : memref<32x1xf32, #tpu.memory_space<vmem>>, vector<32x1xf32>
    %3 = vector.broadcast %2 : vector<32x1xf32> to vector<32x128xf32>
    %4 = arith.mulf %1, %3 : vector<32x128xf32>
    %cst = arith.constant dense<0.000000e+00> : vector<128xf32>
    %5 = vector.multi_reduction <add>, %4, %cst [0] : vector<32x128xf32> to vector<128xf32>
    %6 = vector.shape_cast %5 : vector<128xf32> to vector<1x128xf32>
    %7 = vector.broadcast %0 : f32 to vector<1x128xf32>
    %8 = arith.addf %6, %7 : vector<1x128xf32>
    %c0_4 = arith.constant 0 : index
    %c0_5 = arith.constant 0 : index
    %9 = vector.load %arg4[%c0_4, %c0_5] : memref<1x128xf32, #tpu.memory_space<vmem>>, vector<1x128xf32>
    tpu.vector_store %arg4[%c0_4, %c0_5], %8 {strides = array<i32>} : memref<1x128xf32, #tpu.memory_space<vmem>>, vector<1x128xf32>,
    %cst_6 = arith.constant 0.000000e+00 : f32
    %10 = vector.broadcast %cst_6 : f32 to vector<1x128xf32>
    %11 = arith.cmpf oge, %8, %10 : vector<1x128xf32>
    %cst_7 = arith.constant 1.000000e+00 : f32
    %cst_8 = arith.constant -1.000000e+00 : f32
    %12 = vector.broadcast %cst_7 : f32 to vector<1x128xf32>
    %13 = vector.broadcast %cst_8 : f32 to vector<1x128xf32>
    %14 = arith.select %11, %12, %13 : vector<1x128xi1>, vector<1x128xf32>
    %c0_9 = arith.constant 0 : index
    %c0_10 = arith.constant 0 : index
    %15 = vector.load %arg5[%c0_9, %c0_10] : memref<1x128xf32, #tpu.memory_space<vmem>>, vector<1x128xf32>
    tpu.vector_store %arg5[%c0_9, %c0_10], %14 {strides = array<i32>} : memref<1x128xf32, #tpu.memory_space<vmem>>, vector<1x128xf32>,
    return
  }
  func.func @transform_0(%arg0: i32) -> i32 {
    %c0_i32 = arith.constant 0 : i32
    %c0_i32_0 = arith.constant 0 : i32
    return %c0_i32 : i32
  }
  func.func @transform_1(%arg0: i32) -> (i32, i32) {
    %c0_i32 = arith.constant 0 : i32
    %c0_i32_0 = arith.constant 0 : i32
    %c0_i32_1 = arith.constant 0 : i32
    return %c0_i32, %c0_i32_0 : i32, i32
  }
  func.func @transform_2(%arg0: i32) -> (i32, i32) {
    %c0_i32 = arith.constant 0 : i32
    %c0_i32_0 = arith.constant 0 : i32
    return %c0_i32, %arg0 : i32, i32
  }
  func.func @transform_3(%arg0: i32) -> (i32, i32) {
    %c0_i32 = arith.constant 0 : i32
    %c0_i32_0 = arith.constant 0 : i32
    return %c0_i32, %arg0 : i32, i32
  }
  func.func @transform_4(%arg0: i32) -> (i32, i32) {
    %c0_i32 = arith.constant 0 : i32
    %c0_i32_0 = arith.constant 0 : i32
    return %c0_i32, %arg0 : i32, i32
  }
}

</mosaic_0001>

<llo_original>
// kernel: tpu_custom_call.1
$region0: #{tpu_custom_call.1}
  #allocation0 [shape = 'u32[]', space=smem, size = 0x4, offset = 0x4, fixed_abs, tag = 'smem constant byte address 0x4 - core index']
  #allocation1 [shape = 'u32[144,128]{1,0:T(1,128)}', space=vmem, size = 0x12000, scoped, tag = 'internal scratch']
  #allocation2 [shape = 'f32[1]{0:T(128)S(6)}', space=smem, size = 0x200, scoped, tag = 'scoped memory for tpu_custom_call.1']
  %s0 = inlined_call_operand.<no memory space> [shape: f32[1], index: 0, kind: input, shape index: {}]
  %s1 = inlined_call_operand.vmem [shape: f32[32,1], index: 1, kind: input, shape index: {}]
  %s2 = inlined_call_operand.hbm [shape: f32[32,256], index: 2, kind: input, shape index: {}]
  %s3 = inlined_call_operand.hbm [shape: f32[1,256], index: 3, kind: output, shape index: {0}]
  %s4 = inlined_call_operand.hbm [shape: f32[1,256], index: 4, kind: output, shape index: {1}]
  %5 = xla_tuple %s3, %s4
  %s6 = sld [smem:[#allocation0]]
  $region57: #{tpu_custom_call.1} parent=0
    _
  %s8 = ssub.s32 1, %s6
  %s9 = scalar_select 0, %s8, %s6
  %10 = sst [smem:[#allocation2]] %s0
  $region1: #{tpu_custom_call.1} parent=0
    #allocation3 [shape = 'u8[32768]{0}', space=vmem, size = 0x8000, scoped, tag = 'input window, operand 2']
    #allocation4 [shape = 's32[2]{0}', space=sflag, size = 0x8, scoped, tag = 'scoped memory for tpu_custom_call.1']
    #allocation5 [shape = 's32[2]{0}', space=sflag, size = 0x8, scoped, tag = 'scoped memory for tpu_custom_call.1']
    #allocation6 [shape = 'u8[1024]{0}', space=vmem, size = 0x400, scoped, tag = 'output window, operand 0']
    #allocation7 [shape = 'u8[1024]{0}', space=vmem, size = 0x400, scoped, tag = 'output window, operand 1']
    #allocation8 [shape = 's32[2]{0}', space=sflag, size = 0x8, scoped, tag = 'scoped memory for tpu_custom_call.1']
    %11 = vsyncpa [#allocation4], 0
    %s12 = scalar_lea.sflag [#allocation4], 1
    %13 = vsyncpa %s12, 0
    %14 = vsyncpa [#allocation5], 0
    %s15 = scalar_lea.sflag [#allocation5], 1
    %16 = vsyncpa %s15, 0
    %17 = vsyncpa [#allocation8], 0
    %s18 = scalar_lea.sflag [#allocation8], 1
    %19 = vsyncpa %s18, 0
    loop: start=0, step=1, limit=4
    $region2: #{tpu_custom_call.1} parent=1 // loop_pre_header
      _
    $region3: #{tpu_custom_call.1} parent=1 // loop_header
      %s21 = sphi 0, %s25
      %p22 = scmp.ge.s32.totalorder %s21, 4
      %s29 = sphi 0, %s29
      %s31 = sphi 0, %s29
      %s32 = sphi 0, %s31
      %s46 = sphi 0, %s32
      %s50 = sphi 0, %s50
      %s52 = sphi 0, %s50
      %s53 = sphi 0, %s52
      %s67 = sphi 0, %s53
      %s73 = sphi 0, %s75
      %s76 = sphi 0, %s73
      %s77 = sphi 0, %s76
      %s93 = sphi 0, %s77
      %s99 = sphi 0, %s101
      %s102 = sphi 0, %s99
      %s103 = sphi 0, %s102
      %s119 = sphi 0, %s103
      %s125 = sphi 0, %s127
      %s128 = sphi 0, %s125
      %s129 = sphi 0, %s128
      %s145 = sphi 0, %s129
    $region4: #{tpu_custom_call.1} parent=1 // loop_header_branch
      %24 = sbr.rel (%p22) target = $region8
    $region5: #{tpu_custom_call.1} parent=1 // loop_body
      %s26 = ssub.s32 %s21, 1
      %s27 = ssub.s32 %s21, 2
      %s28 = sadd.s32 %s21, 1
      %s30 = sadd.s32 %s29, 1
      %p33 = scmp.eq.s32.totalorder %s21, 1
      %p34 = scmp.ne.s32.totalorder %s29, %s31
      %p35 = scmp.eq.s32.totalorder %s21, 0
      %p36 = por %p34, %p35
      %p37 = scmp.ne.s32.totalorder %s29, %s31
      %p38 = scmp.eq.s32.totalorder %s26, 1
      %p39 = por %p37, %p38
      %p40 = scmp.ne.s32.totalorder %s31, %s32
      %p41 = scmp.eq.s32.totalorder %s26, 0
      %p42 = por %p40, %p41
      %p43 = scmp.ne.s32.totalorder %s31, %s32
      %p44 = scmp.eq.s32.totalorder %s27, 1
      %p45 = por %p43, %p44
      %p47 = scmp.ne.s32.totalorder %s32, %s46
      %p48 = scmp.eq.s32.totalorder %s27, 0
      %p49 = por %p47, %p48
      %s51 = sadd.s32 %s50, 1
      %p54 = scmp.eq.s32.totalorder %s21, 1
      %p55 = scmp.ne.s32.totalorder %s50, %s52
      %p56 = scmp.eq.s32.totalorder %s21, 0
      %p57 = por %p55, %p56
      %p58 = scmp.ne.s32.totalorder %s50, %s52
      %p59 = scmp.eq.s32.totalorder %s26, 1
      %p60 = por %p58, %p59
      %p61 = scmp.ne.s32.totalorder %s52, %s53
      %p62 = scmp.eq.s32.totalorder %s26, 0
      %p63 = por %p61, %p62
      %p64 = scmp.ne.s32.totalorder %s52, %s53
      %p65 = scmp.eq.s32.totalorder %s27, 1
      %p66 = por %p64, %p65
      %p68 = scmp.ne.s32.totalorder %s53, %s67
      %p69 = scmp.eq.s32.totalorder %s27, 0
      %p70 = por %p68, %p69
      %s71 = ssub.s32 %s21, %s28
      %p72 = scmp.eq.s32.totalorder %s71, 0
      %s74 = sadd.s32 %s73, 1
      %s75 = scalar_select %p72, %s73, %s74
      %p78 = pneg %p72
      %p79 = scmp.eq.s32.totalorder %s21, 1
      %p80 = por %p78, %p79
      %p81 = scmp.ne.s32.totalorder %s73, %s76
      %p82 = scmp.eq.s32.totalorder %s21, 0
      %p83 = por %p81, %p82
      %p84 = scmp.ne.s32.totalorder %s73, %s76
      %p85 = scmp.eq.s32.totalorder %s26, 1
      %p86 = por %p84, %p85
      %p87 = scmp.ne.s32.totalorder %s76, %s77
      %p88 = scmp.eq.s32.totalorder %s26, 0
      %p89 = por %p87, %p88
      %p90 = scmp.ne.s32.totalorder %s76, %s77
      %p91 = scmp.eq.s32.totalorder %s27, 1
      %p92 = por %p90, %p91
      %p94 = scmp.ne.s32.totalorder %s77, %s93
      %p95 = scmp.eq.s32.totalorder %s27, 0
      %p96 = por %p94, %p95
      %s97 = ssub.s32 %s21, %s28
      %p98 = scmp.eq.s32.totalorder %s97, 0
      %s100 = sadd.s32 %s99, 1
      %s101 = scalar_select %p98, %s99, %s100
      %p104 = pneg %p98
      %p105 = scmp.eq.s32.totalorder %s21, 1
      %p106 = por %p104, %p105
      %p107 = scmp.ne.s32.totalorder %s99, %s102
      %p108 = scmp.eq.s32.totalorder %s21, 0
      %p109 = por %p107, %p108
      %p110 = scmp.ne.s32.totalorder %s99, %s102
      %p111 = scmp.eq.s32.totalorder %s26, 1
      %p112 = por %p110, %p111
      %p113 = scmp.ne.s32.totalorder %s102, %s103
      %p114 = scmp.eq.s32.totalorder %s26, 0
      %p115 = por %p113, %p114
      %p116 = scmp.ne.s32.totalorder %s102, %s103
      %p117 = scmp.eq.s32.totalorder %s27, 1
      %p118 = por %p116, %p117
      %p120 = scmp.ne.s32.totalorder %s103, %s119
      %p121 = scmp.eq.s32.totalorder %s27, 0
      %p122 = por %p120, %p121
      %s123 = ssub.s32 %s21, %s28
      %p124 = scmp.eq.s32.totalorder %s123, 0
      %s126 = sadd.s32 %s125, 1
      %s127 = scalar_select %p124, %s125, %s126
      %p130 = pneg %p124
      %p131 = scmp.eq.s32.totalorder %s21, 1
      %p132 = por %p130, %p131
      %p133 = scmp.ne.s32.totalorder %s125, %s128
      %p134 = scmp.eq.s32.totalorder %s21, 0
      %p135 = por %p133, %p134
      %p136 = scmp.ne.s32.totalorder %s125, %s128
      %p137 = scmp.eq.s32.totalorder %s26, 1
      %p138 = por %p136, %p137
      %p139 = scmp.ne.s32.totalorder %s128, %s129
      %p140 = scmp.eq.s32.totalorder %s26, 0
      %p141 = por %p139, %p140
      %p142 = scmp.ne.s32.totalorder %s128, %s129
      %p143 = scmp.eq.s32.totalorder %s27, 1
      %p144 = por %p142, %p143
      %p146 = scmp.ne.s32.totalorder %s129, %s145
      %p147 = scmp.eq.s32.totalorder %s27, 0
      %p148 = por %p146, %p147
      %p149 = scmp.le.s32.totalorder 1, %s21
      %p150 = scmp.lt.s32.totalorder %s21, 3
      %p151 = pnand %p149, %p150
      %p152 = pneg %p151
      // Predicated region
      $region9: #{tpu_custom_call.1} parent=5 // pred_check
        _
      $region10: #{tpu_custom_call.1} parent=5 // pred_check_branch
        %154 = sbr.rel (%p151) target = $region12
      $region11: #{tpu_custom_call.1} parent=5 // pred_region
        %s155 = ssub.s32 %s21, 1
        // Predicated region
        $region13: #{tpu_custom_call.1} parent=11 // pred_check
          %p156 = pneg %p42
        $region14: #{tpu_custom_call.1} parent=11 // pred_check_branch
          %158 = sbr.rel (%p156) target = $region16
        $region15: #{tpu_custom_call.1} parent=11 // pred_region
          _
        $region16: #{tpu_custom_call.1} parent=11 // pred_fallthru
          _
        // Predicated region
        $region17: #{tpu_custom_call.1} parent=11 // pred_check
          %p159 = pneg %p63
        $region18: #{tpu_custom_call.1} parent=11 // pred_check_branch
          %161 = sbr.rel (%p159) target = $region20
        $region19: #{tpu_custom_call.1} parent=11 // pred_region
          _
        $region20: #{tpu_custom_call.1} parent=11 // pred_fallthru
          _
      $region12: #{tpu_custom_call.1} parent=5 // pred_fallthru
        _
      %p162 = scmp.lt.s32.totalorder %s21, 2
      // Predicated region
      $region21: #{tpu_custom_call.1} parent=5 // pred_check
        %p163 = pneg %p162
      $region22: #{tpu_custom_call.1} parent=5 // pred_check_branch
        %165 = sbr.rel (%p163) target = $region24
      $region23: #{tpu_custom_call.1} parent=5 // pred_region
        // Predicated region
        $region25: #{tpu_custom_call.1} parent=23 // pred_check
          %p166 = pneg %p83
        $region26: #{tpu_custom_call.1} parent=23 // pred_check_branch
          %168 = sbr.rel (%p166) target = $region28
        $region27: #{tpu_custom_call.1} parent=23 // pred_region
          %s169 = sand.u32 %s73, 1
          %s170 = scalar_lea.sflag [#allocation4], %s169
          %s171 = sand.u32 %s73, 1
          %s172 = smul.addr %s171, 32
          %s173 = scalar_lea.vmem [#allocation3], %s172
          %s175 = ssub.s32 512, 512
          %176 = vsyncadd %s170, %s175
          %s177 = smul.addr %s21, 128
          %s178 = scalar_lea.hbm %s2, %s177
          %s179 = sshll.u32 %s173, 4
          %s180 = int_to_ptr.vmem [resolvable:$true] %s179
          %185 = dma.hbm_to_vmem [thread:$0]  %s178, 512, %s180, %s170, 256, 128, 8
        $region28: #{tpu_custom_call.1} parent=23 // pred_fallthru
          _
      $region24: #{tpu_custom_call.1} parent=5 // pred_fallthru
        _
      %p186 = scmp.le.s32.totalorder 1, %s21
      %p187 = scmp.lt.s32.totalorder %s21, 3
      %p188 = pnand %p186, %p187
      %p189 = pneg %p188
      // Predicated region
      $region29: #{tpu_custom_call.1} parent=5 // pred_check
        _
      $region30: #{tpu_custom_call.1} parent=5 // pred_check_branch
        %191 = sbr.rel (%p188) target = $region32
      $region31: #{tpu_custom_call.1} parent=5 // pred_region
        %s192 = ssub.s32 %s21, 1
        %s193 = sand.u32 %s76, 1
        %s194 = scalar_lea.sflag [#allocation4], %s193
        %s195 = sand.u32 %s76, 1
        %s196 = smul.addr %s195, 32
        %s197 = scalar_lea.vmem [#allocation3], %s196
        // Predicated region
        $region33: #{tpu_custom_call.1} parent=31 // pred_check
          %p198 = pneg %p89
        $region34: #{tpu_custom_call.1} parent=31 // pred_check_branch
          %200 = sbr.rel (%p198) target = $region36
        $region35: #{tpu_custom_call.1} parent=31 // pred_region
          %201 = dma.done %s194, 512
        $region36: #{tpu_custom_call.1} parent=31 // pred_fallthru
          _
        %p202 = pneg %p42
        %p203 = pneg %p39
        %p204 = pneg %p63
        %p205 = pneg %p60
        %s206 = sand.u32 %s76, 1
        %s207 = scalar_lea.sflag [#allocation4], %s206
        %s208 = sand.u32 %s76, 1
        %s209 = smul.addr %s208, 32
        %s210 = scalar_lea.vmem [#allocation3], %s209
        %p211 = pneg %p89
        %p212 = pneg %p86
        %p213 = pneg %p115
        %p214 = pneg %p112
        %s215 = sand.u32 %s102, 1
        %s216 = scalar_lea.sflag [#allocation5], %s215
        %s217 = sand.u32 %s102, 1
        %s218 = scalar_lea.vmem [#allocation6], %s217
        %p219 = pneg %p141
        %p220 = pneg %p138
        %s221 = sand.u32 %s128, 1
        %s222 = scalar_lea.sflag [#allocation8], %s221
        %s223 = sand.u32 %s128, 1
        %s224 = scalar_lea.vmem [#allocation7], %s223
        %s225 = sld [smem:[#allocation2]]
        %v226 = vld [vmem:[%s197] sm:$0xff]
        %v227 = vld [vmem:[%s197 + $0x8] sm:$0xff]
        %v228 = vld [vmem:[%s197 + $0x10] sm:$0xff]
        %v229 = vld [vmem:[%s197 + $0x18] sm:$0xff]
        %v230 = vld [vmem:[%s1] sm:$0xff]
        %v231 = vld [vmem:[%s1 + $0x8] sm:$0xff]
        %v232 = vld [vmem:[%s1 + $0x10] sm:$0xff]
        %v233 = vld [vmem:[%s1 + $0x18] sm:$0xff]
        %235 = vset.pattern.permute.xlu0 0
        %236 = vperm.xlu0 %235, %v230
        %v237 = vpop.permute.xlu0 %236
        %240 = vset.pattern.permute.xlu0 0
        %241 = vperm.xlu0 %240, %v231
        %v242 = vpop.permute.xlu0 %241
        %245 = vset.pattern.permute.xlu0 0
        %246 = vperm.xlu0 %245, %v232
        %v247 = vpop.permute.xlu0 %246
        %250 = vset.pattern.permute.xlu0 0
        %251 = vperm.xlu0 %250, %v233
        %v252 = vpop.permute.xlu0 %251
        %v254 = vmul.f32 %v226, %v237
        %v255 = vmul.f32 %v227, %v242
        %v256 = vmul.f32 %v228, %v247
        %v257 = vmul.f32 %v229, %v252
        %v258 = vadd.f32 %v254, %v255
        %v259 = vadd.f32 %v258, %v256
        %v260 = vadd.f32 %v259, %v257
        %v261 = vrot.slane %v260, 4
        %v262 = vadd.f32 %v260, %v261
        %v263 = vrot.slane %v262, 2
        %v264 = vadd.f32 %v262, %v263
        %v265 = vrot.slane %v264, 1
        %v266 = vadd.f32 %v264, %v265
        %v267 = vstv %s225
        %v268 = vadd.f32 %v266, %v267
        %269 = vst [vmem:[%s218] sm:$0x1] %v268
        %vm270 = vcmp.ge.f32.partialorder %v268, 0.0
        %v271 = vsel %vm270, 1.0, -1.0
        %272 = vst [vmem:[%s224] sm:$0x1] %v271
        %s273 = sand.u32 %s102, 1
        %s274 = scalar_lea.sflag [#allocation5], %s273
        %s275 = sand.u32 %s102, 1
        %s276 = scalar_lea.vmem [#allocation6], %s275
        %s277 = sand.u32 %s128, 1
        %s278 = scalar_lea.sflag [#allocation8], %s277
        %s279 = sand.u32 %s128, 1
        %s280 = scalar_lea.vmem [#allocation7], %s279
        // Predicated region
        $region37: #{tpu_custom_call.1} parent=31 // pred_check
          %p281 = pneg %p112
        $region38: #{tpu_custom_call.1} parent=31 // pred_check_branch
          %283 = sbr.rel (%p281) target = $region40
        $region39: #{tpu_custom_call.1} parent=31 // pred_region
          %s285 = ssub.s32 16, 16
          %286 = vsyncadd %s274, %s285
          %s287 = smul.addr %s26, 16
          %s288 = scalar_lea.hbm %s3, %s287
          %s290 = sshll.u32 %s276, 4
          %s291 = int_to_ptr.vmem [resolvable:$true] %s290
          %293 = dma.vmem_to_hbm [thread:$0]  %s291, 16, %s288, %s274
        $region40: #{tpu_custom_call.1} parent=31 // pred_fallthru
          _
        // Predicated region
        $region41: #{tpu_custom_call.1} parent=31 // pred_check
          %p294 = pneg %p138
        $region42: #{tpu_custom_call.1} parent=31 // pred_check_branch
          %296 = sbr.rel (%p294) target = $region44
        $region43: #{tpu_custom_call.1} parent=31 // pred_region
          %s298 = ssub.s32 16, 16
          %299 = vsyncadd %s278, %s298
          %s300 = smul.addr %s26, 16
          %s301 = scalar_lea.hbm %s4, %s300
          %s303 = sshll.u32 %s280, 4
          %s304 = int_to_ptr.vmem [resolvable:$true] %s303
          %306 = dma.vmem_to_hbm [thread:$0]  %s304, 16, %s301, %s278
        $region44: #{tpu_custom_call.1} parent=31 // pred_fallthru
          _
      $region32: #{tpu_custom_call.1} parent=5 // pred_fallthru
        _
      %p307 = scmp.le.s32.totalorder 2, %s21
      // Predicated region
      $region45: #{tpu_custom_call.1} parent=5 // pred_check
        %p308 = pneg %p307
      $region46: #{tpu_custom_call.1} parent=5 // pred_check_branch
        %310 = sbr.rel (%p308) target = $region48
      $region47: #{tpu_custom_call.1} parent=5 // pred_region
        %s311 = ssub.s32 %s21, 2
        // Predicated region
        $region49: #{tpu_custom_call.1} parent=47 // pred_check
          %p312 = pneg %p118
        $region50: #{tpu_custom_call.1} parent=47 // pred_check_branch
          %314 = sbr.rel (%p312) target = $region52
        $region51: #{tpu_custom_call.1} parent=47 // pred_region
          %s315 = sand.u32 %s103, 1
          %s316 = scalar_lea.sflag [#allocation5], %s315
          %s317 = sand.u32 %s103, 1
          %s318 = scalar_lea.vmem [#allocation6], %s317
          %319 = dma.done %s316, 16
        $region52: #{tpu_custom_call.1} parent=47 // pred_fallthru
          _
        // Predicated region
        $region53: #{tpu_custom_call.1} parent=47 // pred_check
          %p320 = pneg %p144
        $region54: #{tpu_custom_call.1} parent=47 // pred_check_branch
          %322 = sbr.rel (%p320) target = $region56
        $region55: #{tpu_custom_call.1} parent=47 // pred_region
          %s323 = sand.u32 %s129, 1
          %s324 = scalar_lea.sflag [#allocation8], %s323
          %s325 = sand.u32 %s129, 1
          %s326 = scalar_lea.vmem [#allocation7], %s325
          %327 = dma.done %s324, 16
        $region56: #{tpu_custom_call.1} parent=47 // pred_fallthru
          _
      $region48: #{tpu_custom_call.1} parent=5 // pred_fallthru
        _
    $region6: #{tpu_custom_call.1} parent=1 // loop_footer
      %s25 = sadd.s32 1, %s21
    $region7: #{tpu_custom_call.1} parent=1 // loop_footer_branch
      %20 = sbr.rel target = $region3
    $region8: #{tpu_custom_call.1} parent=1 // loop_exit
      _
    %328 = vsyncpa [#allocation4], 1
    %s329 = scalar_lea.sflag [#allocation4], 1
    %330 = vsyncpa %s329, 1
    %331 = vsyncpa [#allocation5], 1
    %s332 = scalar_lea.sflag [#allocation5], 1
    %333 = vsyncpa %s332, 1
    %334 = vsyncpa [#allocation8], 1
    %s335 = scalar_lea.sflag [#allocation8], 1
    %336 = vsyncpa %s335, 1

</llo_original>
